<compile_context>
chip_gen: v6e
topology: v6e:2x2x1
jax: 0.10.0
libtpu: 0.0.40
codegen_flags: <defaults>
</compile_context>

<pallas_src>
import jax
import jax.numpy as jnp
from jax.experimental import pallas as pl
from jax.experimental.pallas import tpu as pltpu

LANE = 128      # lane width: vocab dim padded to a multiple of 128
SUBLANE = 8     # batch padded to a multiple of 8 sublanes


def _round_up(x, m):
    return -(-x // m) * m


def decoder_steps_kernel(ids_ref,                                  # SMEM (T, B) i32
                         emb_ref, h0_ref, wih_ref, whh_ref,
                         bih_ref, bhh_ref, wout_ref, bout_ref,     # VMEM weights
                         logp_ref, hnew_ref,                       # outputs
                         h_sc):                                    # VMEM (B, H) carry
    t = pl.program_id(0)
    B, H = h_sc.shape
    VPAD = logp_ref.shape[-1]

    @pl.when(t == 0)
    def _():
        h_sc[...] = h0_ref[...]

    # Token ids for this step from SMEM (scalar prefetch): build a (B,1) id
    # column, then a lane-dense one-hot so the embedding gather runs on the MXU.
    row = jax.lax.broadcasted_iota(jnp.int32, (B, 1), 0)
    idx_col = jnp.zeros((B, 1), jnp.int32)
    for b in range(B):
        idx_col = jnp.where(row == b, ids_ref[t, b], idx_col)
    lane = jax.lax.broadcasted_iota(jnp.int32, (B, VPAD), 1)
    one_hot = (lane == idx_col).astype(jnp.bfloat16)

    # Embedding lookup (bf16 MXU, f32 accumulation) + ReLU.
    x = jnp.dot(one_hot, emb_ref[...], preferred_element_type=jnp.float32)
    x = jnp.maximum(x, 0.0)                                        # (B, E) f32

    h = h_sc[...]                                                  # (B, H) f32 carry

    # Fused GRU gates: 2 matmuls instead of 6 (columns are [r | z | n]).
    gx = jnp.dot(x.astype(jnp.bfloat16), wih_ref[...],
                 preferred_element_type=jnp.float32) + bih_ref[...]
    gh = jnp.dot(h.astype(jnp.bfloat16), whh_ref[...],
                 preferred_element_type=jnp.float32) + bhh_ref[...]

    r = jax.nn.sigmoid(gx[:, 0:H] + gh[:, 0:H])
    z = jax.nn.sigmoid(gx[:, H:2 * H] + gh[:, H:2 * H])
    n = jnp.tanh(gx[:, 2 * H:3 * H] + r * gh[:, 2 * H:3 * H])      # r*(Whn h + bhn)
    h_new = (1.0 - z) * n + z * h
    h_sc[...] = h_new

    # Lane-dense output projection + log_softmax; padded columns carry a -1e30
    # bias so exp() underflows to 0 and they drop out of the softmax sum.
    logits = jnp.dot(h_new.astype(jnp.bfloat16), wout_ref[...],
                     preferred_element_type=jnp.float32) + bout_ref[...]
    m = jnp.max(logits, axis=1, keepdims=True)
    s = logits - m
    lse = jnp.log(jnp.sum(jnp.exp(s), axis=1, keepdims=True))
    logp_ref[0, :, :] = s - lse

    @pl.when(t == pl.num_programs(0) - 1)
    def _():
        hnew_ref[...] = h_new


def decoder_forward(ids, hidden, params, vocab):
    """Run T decoder steps in one pallas_call.

    ids:    (T, B) int32 tokens (one per step per stream).
    hidden: (1, B, H) f32 initial hidden state.
    Returns (logp (T, B, vocab) f32, final hidden (1, B, H) f32).
    """
    T, Bl = ids.shape
    H = hidden.shape[-1]
    E = params["emb"].shape[-1]
    H3 = params["wih"].shape[-1]
    VPAD = params["wout"].shape[-1]
    B = max(SUBLANE, _round_up(Bl, SUBLANE))          # pad batch (free compute)

    ids_p = jnp.zeros((T, B), jnp.int32).at[:, :Bl].set(ids.astype(jnp.int32))
    h0_p = jnp.zeros((B, H), jnp.float32).at[:Bl].set(hidden.reshape(Bl, H))

    const = lambda t, ids: (0, 0)                     # DMA once, VMEM-resident
    grid_spec = pltpu.PrefetchScalarGridSpec(
        num_scalar_prefetch=1,                        # token ids live in SMEM
        grid=(T,),
        in_specs=[
            pl.BlockSpec((VPAD, E), const),           # emb (rows padded to VPAD)
            pl.BlockSpec((B, H), const),              # h0
            pl.BlockSpec((E, H3), const),             # wih fused [r|z|n]
            pl.BlockSpec((H, H3), const),             # whh fused [r|z|n]
            pl.BlockSpec((1, H3), const),             # bih
            pl.BlockSpec((1, H3), const),             # bhh
            pl.BlockSpec((H, VPAD), const),           # wout (lane-dense)
            pl.BlockSpec((1, VPAD), const),           # bout (-1e30 pad)
        ],
        out_specs=(
            pl.BlockSpec((1, B, VPAD), lambda t, ids: (t, 0, 0)),   # logp per step
            pl.BlockSpec((B, H), const),                            # final hidden
        ),
        scratch_shapes=[pltpu.VMEM((B, H), jnp.float32)],           # hidden carry
    )

    logp_pad, h_pad = pl.pallas_call(
        decoder_steps_kernel,
        out_shape=(jax.ShapeDtypeStruct((T, B, VPAD), jnp.float32),
                   jax.ShapeDtypeStruct((B, H), jnp.float32)),
        grid_spec=grid_spec,
        compiler_params=pltpu.CompilerParams(
            dimension_semantics=("arbitrary",)),      # time axis is sequential
    )(ids_p, params["emb"], h0_p, params["wih"], params["whh"],
      params["bih"], params["bhh"], params["wout"], params["bout"])

    return logp_pad[:, :Bl, :vocab], h_pad[:Bl].reshape(1, Bl, H)


def init_params(key, vocab, emb_size, hidden_size):
    """Kernel-layout params: fused (.,3H) GRU weights, bf16 weights, padded vocab."""
    ks = jax.random.split(key, 7)
    scale = 1.0 / jnp.sqrt(hidden_size)
    H3 = 3 * hidden_size
    vpad = max(LANE, _round_up(vocab, LANE))

    emb = 0.1 * jax.random.normal(ks[0], (vocab, emb_size), jnp.float32)
    emb_pad = jnp.zeros((vpad, emb_size), jnp.float32).at[:vocab].set(emb)

    wout = jax.random.uniform(ks[5], (hidden_size, vocab), jnp.float32, -scale, scale)
    wout_pad = jnp.zeros((hidden_size, vpad), jnp.float32).at[:, :vocab].set(wout)
    bout = jax.random.uniform(ks[6], (1, vocab), jnp.float32, -scale, scale)
    bout_pad = jnp.full((1, vpad), -1e30, jnp.float32).at[:, :vocab].set(bout)

    return {
        "emb":  emb_pad.astype(jnp.bfloat16),
        "wih":  jax.random.uniform(ks[1], (emb_size, H3), jnp.float32,
                                   -scale, scale).astype(jnp.bfloat16),
        "whh":  jax.random.uniform(ks[2], (hidden_size, H3), jnp.float32,
                                   -scale, scale).astype(jnp.bfloat16),
        "bih":  jax.random.uniform(ks[3], (1, H3), jnp.float32, -scale, scale),
        "bhh":  jax.random.uniform(ks[4], (1, H3), jnp.float32, -scale, scale),
        "wout": wout_pad.astype(jnp.bfloat16),
        "bout": bout_pad,
    }


def decoder_forward_ref(ids, hidden, params, vocab):
    """Pure-JAX reference: T applications of the PyTorch Decoder.forward math
    (embedding -> ReLU -> 1-layer GRU step -> Linear -> log_softmax), using the
    same bf16 matmul inputs / f32 accumulation as the kernel."""
    T, Bl = ids.shape
    H = hidden.shape[-1]
    f32 = jnp.float32
    h = hidden.reshape(Bl, H).astype(f32)
    logps = []
    for t in range(T):
        x = jnp.maximum(params["emb"][ids[t]].astype(f32), 0.0)
        gx = jnp.dot(x.astype(jnp.bfloat16), params["wih"],
                     preferred_element_type=f32) + params["bih"]
        gh = jnp.dot(h.astype(jnp.bfloat16), params["whh"],
                     preferred_element_type=f32) + params["bhh"]
        r = jax.nn.sigmoid(gx[:, 0:H] + gh[:, 0:H])
        z = jax.nn.sigmoid(gx[:, H:2 * H] + gh[:, H:2 * H])
        n = jnp.tanh(gx[:, 2 * H:3 * H] + r * gh[:, 2 * H:3 * H])
        h = (1.0 - z) * n + z * h
        logits = jnp.dot(h.astype(jnp.bfloat16), params["wout"],
                         preferred_element_type=f32) + params["bout"]
        logps.append(jax.nn.log_softmax(logits[:, :vocab], axis=1))
    return jnp.stack(logps, 0), h.reshape(hidden.shape)


if __name__ == "__main__":
    B, E, H, VOCAB, T = 2, 32, 32, 40, 4

    key = jax.random.PRNGKey(0)
    k_par, k_idx, k_h = jax.random.split(key, 3)

    params = init_params(k_par, VOCAB, E, H)
    ids = jax.random.randint(k_idx, (T, B), 0, VOCAB, dtype=jnp.int32)  # T decode steps
    hidden = jax.random.normal(k_h, (1, B, H), jnp.float32)             # (numLayers, B, H)

    logp, h_new = decoder_forward(ids, hidden, params, VOCAB)
    jax.block_until_ready((logp, h_new))

    logp_ref, h_ref = decoder_forward_ref(ids, hidden, params, VOCAB)
    assert logp.shape == (T, B, VOCAB) and h_new.shape == (1, B, H)
    # Tolerance covers transcendental-implementation (EUP vs XLA) ULP differences
    # compounded over T recurrent steps; matmuls match bit-for-bit in structure
    # (bf16 inputs, f32 accumulation) on both paths.
    assert jnp.allclose(logp, logp_ref, atol=1e-3, rtol=1e-3)
    assert jnp.allclose(h_new, h_ref, atol=1e-3, rtol=1e-3)

    print("KERNEL_OK")
</pallas_src>

<mosaic_0001>
module attributes {stable_mosaic.version = 11 : i64} {
  func.func @decoder_steps_kernel(%arg0: i32, %arg1: memref<4x8xi32, #tpu.memory_space<smem>>, %arg2: memref<128x32xbf16, #tpu.memory_space<vmem>>, %arg3: memref<8x32xf32, #tpu.memory_space<vmem>>, %arg4: memref<32x96xbf16, #tpu.memory_space<vmem>>, %arg5: memref<32x96xbf16, #tpu.memory_space<vmem>>, %arg6: memref<1x96xf32, #tpu.memory_space<vmem>>, %arg7: memref<1x96xf32, #tpu.memory_space<vmem>>, %arg8: memref<32x128xbf16, #tpu.memory_space<vmem>>, %arg9: memref<1x128xf32, #tpu.memory_space<vmem>>, %arg10: memref<1x8x128xf32, #tpu.memory_space<vmem>>, %arg11: memref<8x32xf32, #tpu.memory_space<vmem>>, %arg12: memref<8x32xf32, #tpu.memory_space<vmem>>) attributes {dimension_semantics = [#tpu.dimension_semantics<arbitrary>], iteration_bounds = array<i64: 4>, scalar_prefetch = 1 : i64, scratch_operands = 1 : i64, tpu.core_type = #tpu.core_type<tc>, window_params = [{pipeline_mode = #tpu.pipeline_mode<synchronous>, transform_indices = @transform_0, window_bounds = array<i64: 128, 32>}, {pipeline_mode = #tpu.pipeline_mode<synchronous>, transform_indices = @transform_1, window_bounds = array<i64: 8, 32>}, {pipeline_mode = #tpu.pipeline_mode<synchronous>, transform_indices = @transform_2, window_bounds = array<i64: 32, 96>}, {pipeline_mode = #tpu.pipeline_mode<synchronous>, transform_indices = @transform_3, window_bounds = array<i64: 32, 96>}, {pipeline_mode = #tpu.pipeline_mode<synchronous>, transform_indices = @transform_4, window_bounds = array<i64: 1, 96>}, {pipeline_mode = #tpu.pipeline_mode<synchronous>, transform_indices = @transform_5, window_bounds = array<i64: 1, 96>}, {pipeline_mode = #tpu.pipeline_mode<synchronous>, transform_indices = @transform_6, window_bounds = array<i64: 32, 128>}, {pipeline_mode = #tpu.pipeline_mode<synchronous>, transform_indices = @transform_7, window_bounds = array<i64: 1, 128>}, {transform_indices = @transform_8, window_bounds = array<i64: 1, 8, 128>}, {pipeline_mode = #tpu.pipeline_mode<synchronous>, transform_indices = @transform_9, window_bounds = array<i64: 8, 32>}]} {
    %c0_i32 = arith.constant 0 : i32
    %0 = arith.cmpi eq, %arg0, %c0_i32 : i32
    %1 = arith.extui %0 : i1 to i32
    %c0_i32_0 = arith.constant 0 : i32
    %2 = arith.cmpi ne, %1, %c0_i32_0 : i32
    scf.if %2 {
      %c0_35 = arith.constant 0 : index
      %c0_36 = arith.constant 0 : index
      %125 = vector.load %arg3[%c0_35, %c0_36] : memref<8x32xf32, #tpu.memory_space<vmem>>, vector<8x32xf32>
      %c0_37 = arith.constant 0 : index
      %c0_38 = arith.constant 0 : index
      %126 = vector.load %arg12[%c0_37, %c0_38] : memref<8x32xf32, #tpu.memory_space<vmem>>, vector<8x32xf32>
      tpu.vector_store %arg12[%c0_37, %c0_38], %125 {strides = array<i32>} : memref<8x32xf32, #tpu.memory_space<vmem>>, vector<8x32xf32>,
    } else {
    }
    %3 = tpu.iota {dimensions = array<i32: 0>} : vector<8x1xi32>
    %c0_i32_1 = arith.constant 0 : i32
    %4 = vector.broadcast %c0_i32_1 : i32 to vector<8x1xi32>
    %c0_i32_2 = arith.constant 0 : i32
    %5 = vector.broadcast %c0_i32_2 : i32 to vector<8x1xi32>
    %6 = arith.cmpi eq, %3, %5 : vector<8x1xi32>
    %7 = arith.index_cast %arg0 : i32 to index
    %c0 = arith.constant 0 : index
    %8 = memref.load %arg1[%7, %c0] : memref<4x8xi32, #tpu.memory_space<smem>>
    %9 = vector.broadcast %8 : i32 to vector<8x1xi32>
    %10 = arith.select %6, %9, %4 : vector<8x1xi1>, vector<8x1xi32>
    %c1_i32 = arith.constant 1 : i32
    %11 = vector.broadcast %c1_i32 : i32 to vector<8x1xi32>
    %12 = arith.cmpi eq, %3, %11 : vector<8x1xi32>
    %13 = arith.index_cast %arg0 : i32 to index
    %c1 = arith.constant 1 : index
    %14 = memref.load %arg1[%13, %c1] : memref<4x8xi32, #tpu.memory_space<smem>>
    %15 = vector.broadcast %14 : i32 to vector<8x1xi32>
    %16 = arith.select %12, %15, %10 : vector<8x1xi1>, vector<8x1xi32>
    %c2_i32 = arith.constant 2 : i32
    %17 = vector.broadcast %c2_i32 : i32 to vector<8x1xi32>
    %18 = arith.cmpi eq, %3, %17 : vector<8x1xi32>
    %19 = arith.index_cast %arg0 : i32 to index
    %c2 = arith.constant 2 : index
    %20 = memref.load %arg1[%19, %c2] : memref<4x8xi32, #tpu.memory_space<smem>>
    %21 = vector.broadcast %20 : i32 to vector<8x1xi32>
    %22 = arith.select %18, %21, %16 : vector<8x1xi1>, vector<8x1xi32>
    %c3_i32 = arith.constant 3 : i32
    %23 = vector.broadcast %c3_i32 : i32 to vector<8x1xi32>
    %24 = arith.cmpi eq, %3, %23 : vector<8x1xi32>
    %25 = arith.index_cast %arg0 : i32 to index
    %c3 = arith.constant 3 : index
    %26 = memref.load %arg1[%25, %c3] : memref<4x8xi32, #tpu.memory_space<smem>>
    %27 = vector.broadcast %26 : i32 to vector<8x1xi32>
    %28 = arith.select %24, %27, %22 : vector<8x1xi1>, vector<8x1xi32>
    %c4_i32 = arith.constant 4 : i32
    %29 = vector.broadcast %c4_i32 : i32 to vector<8x1xi32>
    %30 = arith.cmpi eq, %3, %29 : vector<8x1xi32>
    %31 = arith.index_cast %arg0 : i32 to index
    %c4 = arith.constant 4 : index
    %32 = memref.load %arg1[%31, %c4] : memref<4x8xi32, #tpu.memory_space<smem>>
    %33 = vector.broadcast %32 : i32 to vector<8x1xi32>
    %34 = arith.select %30, %33, %28 : vector<8x1xi1>, vector<8x1xi32>
    %c5_i32 = arith.constant 5 : i32
    %35 = vector.broadcast %c5_i32 : i32 to vector<8x1xi32>
    %36 = arith.cmpi eq, %3, %35 : vector<8x1xi32>
    %37 = arith.index_cast %arg0 : i32 to index
    %c5 = arith.constant 5 : index
    %38 = memref.load %arg1[%37, %c5] : memref<4x8xi32, #tpu.memory_space<smem>>
    %39 = vector.broadcast %38 : i32 to vector<8x1xi32>
    %40 = arith.select %36, %39, %34 : vector<8x1xi1>, vector<8x1xi32>
    %c6_i32 = arith.constant 6 : i32
    %41 = vector.broadcast %c6_i32 : i32 to vector<8x1xi32>
    %42 = arith.cmpi eq, %3, %41 : vector<8x1xi32>
    %43 = arith.index_cast %arg0 : i32 to index
    %c6 = arith.constant 6 : index
    %44 = memref.load %arg1[%43, %c6] : memref<4x8xi32, #tpu.memory_space<smem>>
    %45 = vector.broadcast %44 : i32 to vector<8x1xi32>
    %46 = arith.select %42, %45, %40 : vector<8x1xi1>, vector<8x1xi32>
    %c7_i32 = arith.constant 7 : i32
    %47 = vector.broadcast %c7_i32 : i32 to vector<8x1xi32>
    %48 = arith.cmpi eq, %3, %47 : vector<8x1xi32>
    %49 = arith.index_cast %arg0 : i32 to index
    %c7 = arith.constant 7 : index
    %50 = memref.load %arg1[%49, %c7] : memref<4x8xi32, #tpu.memory_space<smem>>
    %51 = vector.broadcast %50 : i32 to vector<8x1xi32>
    %52 = arith.select %48, %51, %46 : vector<8x1xi1>, vector<8x1xi32>
    %53 = tpu.iota {dimensions = array<i32: 1>} : vector<8x128xi32>
    %54 = vector.broadcast %52 : vector<8x1xi32> to vector<8x128xi32>
    %55 = arith.cmpi eq, %53, %54 : vector<8x128xi32>
    %56 = arith.extui %55 : vector<8x128xi1> to vector<8x128xi32>
    %57 = arith.sitofp %56 : vector<8x128xi32> to vector<8x128xf32>
    %58 = arith.truncf %57 : vector<8x128xf32> to vector<8x128xbf16>
    %c0_3 = arith.constant 0 : index
    %c0_4 = arith.constant 0 : index
    %59 = vector.load %arg2[%c0_3, %c0_4] : memref<128x32xbf16, #tpu.memory_space<vmem>>, vector<128x32xbf16>
    %cst = arith.constant dense<0.000000e+00> : vector<8x32xf32>
    %60 = tpu.matmul %58, %59, %cst {dimension_numbers = #tpu.dot_dimension_numbers<[1], [0], [0], [1], [0, 0, 1, 1], [], []>} : vector<8x128xbf16>, vector<128x32xbf16>, vector<8x32xf32> -> vector<8x32xf32>
    %cst_5 = arith.constant 0.000000e+00 : f32
    %61 = vector.broadcast %cst_5 : f32 to vector<8x32xf32>
    %62 = arith.maximumf %60, %61 : vector<8x32xf32>
    %c0_6 = arith.constant 0 : index
    %c0_7 = arith.constant 0 : index
    %63 = vector.load %arg12[%c0_6, %c0_7] : memref<8x32xf32, #tpu.memory_space<vmem>>, vector<8x32xf32>
    %64 = arith.truncf %62 : vector<8x32xf32> to vector<8x32xbf16>
    %c0_8 = arith.constant 0 : index
    %c0_9 = arith.constant 0 : index
    %65 = vector.load %arg4[%c0_8, %c0_9] : memref<32x96xbf16, #tpu.memory_space<vmem>>, vector<32x96xbf16>
    %cst_10 = arith.constant dense<0.000000e+00> : vector<8x96xf32>
    %66 = tpu.matmul %64, %65, %cst_10 {dimension_numbers = #tpu.dot_dimension_numbers<[1], [0], [0], [1], [0, 0, 1, 1], [], []>} : vector<8x32xbf16>, vector<32x96xbf16>, vector<8x96xf32> -> vector<8x96xf32>
    %c0_11 = arith.constant 0 : index
    %c0_12 = arith.constant 0 : index
    %67 = vector.load %arg6[%c0_11, %c0_12] : memref<1x96xf32, #tpu.memory_space<vmem>>, vector<1x96xf32>
    %68 = vector.broadcast %67 : vector<1x96xf32> to vector<8x96xf32>
    %69 = arith.addf %66, %68 : vector<8x96xf32>
    %70 = arith.truncf %63 : vector<8x32xf32> to vector<8x32xbf16>
    %c0_13 = arith.constant 0 : index
    %c0_14 = arith.constant 0 : index
    %71 = vector.load %arg5[%c0_13, %c0_14] : memref<32x96xbf16, #tpu.memory_space<vmem>>, vector<32x96xbf16>
    %cst_15 = arith.constant dense<0.000000e+00> : vector<8x96xf32>
    %72 = tpu.matmul %70, %71, %cst_15 {dimension_numbers = #tpu.dot_dimension_numbers<[1], [0], [0], [1], [0, 0, 1, 1], [], []>} : vector<8x32xbf16>, vector<32x96xbf16>, vector<8x96xf32> -> vector<8x96xf32>
    %c0_16 = arith.constant 0 : index
    %c0_17 = arith.constant 0 : index
    %73 = vector.load %arg7[%c0_16, %c0_17] : memref<1x96xf32, #tpu.memory_space<vmem>>, vector<1x96xf32>
    %74 = vector.broadcast %73 : vector<1x96xf32> to vector<8x96xf32>
    %75 = arith.addf %72, %74 : vector<8x96xf32>
    %76 = vector.extract_strided_slice %69 {offsets = [0, 0], sizes = [8, 32], strides = [1, 1]} : vector<8x96xf32> to vector<8x32xf32>
    %77 = vector.extract_strided_slice %75 {offsets = [0, 0], sizes = [8, 32], strides = [1, 1]} : vector<8x96xf32> to vector<8x32xf32>
    %78 = arith.addf %76, %77 : vector<8x32xf32>
    %79 = arith.negf %78 : vector<8x32xf32>
    %80 = math.exp %79 : vector<8x32xf32>
    %cst_18 = arith.constant 1.000000e+00 : f32
    %81 = vector.broadcast %cst_18 : f32 to vector<8x32xf32>
    %82 = arith.addf %81, %80 : vector<8x32xf32>
    %83 = arith.divf %81, %82 : vector<8x32xf32>
    %84 = vector.extract_strided_slice %69 {offsets = [0, 32], sizes = [8, 32], strides = [1, 1]} : vector<8x96xf32> to vector<8x32xf32>
    %85 = vector.extract_strided_slice %75 {offsets = [0, 32], sizes = [8, 32], strides = [1, 1]} : vector<8x96xf32> to vector<8x32xf32>
    %86 = arith.addf %84, %85 : vector<8x32xf32>
    %87 = arith.negf %86 : vector<8x32xf32>
    %88 = math.exp %87 : vector<8x32xf32>
    %cst_19 = arith.constant 1.000000e+00 : f32
    %89 = vector.broadcast %cst_19 : f32 to vector<8x32xf32>
    %90 = arith.addf %89, %88 : vector<8x32xf32>
    %91 = arith.divf %89, %90 : vector<8x32xf32>
    %92 = vector.extract_strided_slice %69 {offsets = [0, 64], sizes = [8, 32], strides = [1, 1]} : vector<8x96xf32> to vector<8x32xf32>
    %93 = vector.extract_strided_slice %75 {offsets = [0, 64], sizes = [8, 32], strides = [1, 1]} : vector<8x96xf32> to vector<8x32xf32>
    %94 = arith.mulf %83, %93 : vector<8x32xf32>
    %95 = arith.addf %92, %94 : vector<8x32xf32>
    %96 = math.tanh %95 : vector<8x32xf32>
    %cst_20 = arith.constant 1.000000e+00 : f32
    %97 = vector.broadcast %cst_20 : f32 to vector<8x32xf32>
    %98 = arith.subf %97, %91 : vector<8x32xf32>
    %99 = arith.mulf %98, %96 : vector<8x32xf32>
    %100 = arith.mulf %91, %63 : vector<8x32xf32>
    %101 = arith.addf %99, %100 : vector<8x32xf32>
    %c0_21 = arith.constant 0 : index
    %c0_22 = arith.constant 0 : index
    %102 = vector.load %arg12[%c0_21, %c0_22] : memref<8x32xf32, #tpu.memory_space<vmem>>, vector<8x32xf32>
    tpu.vector_store %arg12[%c0_21, %c0_22], %101 {strides = array<i32>} : memref<8x32xf32, #tpu.memory_space<vmem>>, vector<8x32xf32>,
    %103 = arith.truncf %101 : vector<8x32xf32> to vector<8x32xbf16>
    %c0_23 = arith.constant 0 : index
    %c0_24 = arith.constant 0 : index
    %104 = vector.load %arg8[%c0_23, %c0_24] : memref<32x128xbf16, #tpu.memory_space<vmem>>, vector<32x128xbf16>
    %cst_25 = arith.constant dense<0.000000e+00> : vector<8x128xf32>
    %105 = tpu.matmul %103, %104, %cst_25 {dimension_numbers = #tpu.dot_dimension_numbers<[1], [0], [0], [1], [0, 0, 1, 1], [], []>} : vector<8x32xbf16>, vector<32x128xbf16>, vector<8x128xf32> -> vector<8x128xf32>
    %c0_26 = arith.constant 0 : index
    %c0_27 = arith.constant 0 : index
    %106 = vector.load %arg9[%c0_26, %c0_27] : memref<1x128xf32, #tpu.memory_space<vmem>>, vector<1x128xf32>
    %107 = vector.broadcast %106 : vector<1x128xf32> to vector<8x128xf32>
    %108 = arith.addf %105, %107 : vector<8x128xf32>
    %cst_28 = arith.constant dense<0xFF800000> : vector<8xf32>
    %109 = vector.multi_reduction <maximumf>, %108, %cst_28 [1] : vector<8x128xf32> to vector<8xf32>
    %110 = vector.shape_cast %109 : vector<8xf32> to vector<8x1xf32>
    %111 = vector.broadcast %110 : vector<8x1xf32> to vector<8x128xf32>
    %112 = arith.subf %108, %111 : vector<8x128xf32>
    %113 = math.exp %112 : vector<8x128xf32>
    %cst_29 = arith.constant dense<0.000000e+00> : vector<8xf32>
    %114 = vector.multi_reduction <add>, %113, %cst_29 [1] : vector<8x128xf32> to vector<8xf32>
    %115 = vector.shape_cast %114 : vector<8xf32> to vector<8x1xf32>
    %116 = math.log %115 : vector<8x1xf32>
    %117 = vector.broadcast %116 : vector<8x1xf32> to vector<8x128xf32>
    %118 = arith.subf %112, %117 : vector<8x128xf32>
    %c0_30 = arith.constant 0 : index
    %c0_31 = arith.constant 0 : index
    %c0_32 = arith.constant 0 : index
    %119 = vector.load %arg10[%c0_30, %c0_31, %c0_32] : memref<1x8x128xf32, #tpu.memory_space<vmem>>, vector<1x8x128xf32>
    %120 = vector.shape_cast %119 : vector<1x8x128xf32> to vector<8x128xf32>
    %121 = vector.shape_cast %118 : vector<8x128xf32> to vector<1x8x128xf32>
    tpu.vector_store %arg10[%c0_30, %c0_31, %c0_32], %121 {strides = array<i32>} : memref<1x8x128xf32, #tpu.memory_space<vmem>>, vector<1x8x128xf32>,
    %c3_i32_33 = arith.constant 3 : i32
    %122 = arith.cmpi eq, %arg0, %c3_i32_33 : i32
    %123 = arith.extui %122 : i1 to i32
    %c0_i32_34 = arith.constant 0 : i32
    %124 = arith.cmpi ne, %123, %c0_i32_34 : i32
    scf.if %124 {
      %c0_35 = arith.constant 0 : index
      %c0_36 = arith.constant 0 : index
      %125 = vector.load %arg11[%c0_35, %c0_36] : memref<8x32xf32, #tpu.memory_space<vmem>>, vector<8x32xf32>
      tpu.vector_store %arg11[%c0_35, %c0_36], %101 {strides = array<i32>} : memref<8x32xf32, #tpu.memory_space<vmem>>, vector<8x32xf32>,
    } else {
    }
    return
  }
  func.func @transform_0(%arg0: i32, %arg1: memref<4x8xi32, #tpu.memory_space<smem>>) -> (i32, i32) {
    %c0_i32 = arith.constant 0 : i32
    %c0_i32_0 = arith.constant 0 : i32
    %c0_i32_1 = arith.constant 0 : i32
    return %c0_i32, %c0_i32_0 : i32, i32
  }
  func.func @transform_1(%arg0: i32, %arg1: memref<4x8xi32, #tpu.memory_space<smem>>) -> (i32, i32) {
    %c0_i32 = arith.constant 0 : i32
    %c0_i32_0 = arith.constant 0 : i32
    %c0_i32_1 = arith.constant 0 : i32
    return %c0_i32, %c0_i32_0 : i32, i32
  }
  func.func @transform_2(%arg0: i32, %arg1: memref<4x8xi32, #tpu.memory_space<smem>>) -> (i32, i32) {
    %c0_i32 = arith.constant 0 : i32
    %c0_i32_0 = arith.constant 0 : i32
    %c0_i32_1 = arith.constant 0 : i32
    return %c0_i32, %c0_i32_0 : i32, i32
  }
  func.func @transform_3(%arg0: i32, %arg1: memref<4x8xi32, #tpu.memory_space<smem>>) -> (i32, i32) {
    %c0_i32 = arith.constant 0 : i32
    %c0_i32_0 = arith.constant 0 : i32
    %c0_i32_1 = arith.constant 0 : i32
    return %c0_i32, %c0_i32_0 : i32, i32
  }
  func.func @transform_4(%arg0: i32, %arg1: memref<4x8xi32, #tpu.memory_space<smem>>) -> (i32, i32) {
    %c0_i32 = arith.constant 0 : i32
    %c0_i32_0 = arith.constant 0 : i32
    %c0_i32_1 = arith.constant 0 : i32
    return %c0_i32, %c0_i32_0 : i32, i32
  }
  func.func @transform_5(%arg0: i32, %arg1: memref<4x8xi32, #tpu.memory_space<smem>>) -> (i32, i32) {
    %c0_i32 = arith.constant 0 : i32
    %c0_i32_0 = arith.constant 0 : i32
    %c0_i32_1 = arith.constant 0 : i32
    return %c0_i32, %c0_i32_0 : i32, i32
  }
  func.func @transform_6(%arg0: i32, %arg1: memref<4x8xi32, #tpu.memory_space<smem>>) -> (i32, i32) {
    %c0_i32 = arith.constant 0 : i32
    %c0_i32_0 = arith.constant 0 : i32
    %c0_i32_1 = arith.constant 0 : i32
    return %c0_i32, %c0_i32_0 : i32, i32
  }
  func.func @transform_7(%arg0: i32, %arg1: memref<4x8xi32, #tpu.memory_space<smem>>) -> (i32, i32) {
    %c0_i32 = arith.constant 0 : i32
    %c0_i32_0 = arith.constant 0 : i32
    %c0_i32_1 = arith.constant 0 : i32
    return %c0_i32, %c0_i32_0 : i32, i32
  }
  func.func @transform_8(%arg0: i32, %arg1: memref<4x8xi32, #tpu.memory_space<smem>>) -> (i32, i32, i32) {
    %c0_i32 = arith.constant 0 : i32
    %c0_i32_0 = arith.constant 0 : i32
    %c0_i32_1 = arith.constant 0 : i32
    return %arg0, %c0_i32, %c0_i32_0 : i32, i32, i32
  }
  func.func @transform_9(%arg0: i32, %arg1: memref<4x8xi32, #tpu.memory_space<smem>>) -> (i32, i32) {
    %c0_i32 = arith.constant 0 : i32
    %c0_i32_0 = arith.constant 0 : i32
    %c0_i32_1 = arith.constant 0 : i32
    return %c0_i32, %c0_i32_0 : i32, i32
  }
}

</mosaic_0001>

<llo_original>
// kernel: tpu_custom_call.1
$region0: #{tpu_custom_call.1}
  #allocation0 [shape = 'u32[]', space=smem, size = 0x4, offset = 0x4, fixed_abs, tag = 'smem constant byte address 0x4 - core index']
  #allocation1 [shape = 'u32[144,128]{1,0:T(1,128)}', space=vmem, size = 0x12000, scoped, tag = 'internal scratch']
  #allocation2 [shape = 'f32[8,32]{1,0:T(8,128)}', space=vmem, size = 0x1000, scoped, tag = 'scratch operand']
  #allocation3 [shape = 's32[1]{0}', space=sflag, size = 0x4, scoped, tag = 'scoped memory for tpu_custom_call.1']
  #allocation4 [shape = 'u8[2048]{0}', space=smem, size = 0x800, scoped, tag = 'prefetched SMEM operand 0']
  %s0 = inlined_call_operand.vmem [shape: s32[4,8], index: 0, kind: input, shape index: {}]
  %s1 = inlined_call_operand.vmem [shape: bf16[128,32], index: 1, kind: input, shape index: {}]
  %s2 = inlined_call_operand.vmem [shape: f32[8,32], index: 2, kind: input, shape index: {}]
  %s3 = inlined_call_operand.vmem [shape: bf16[32,96], index: 3, kind: input, shape index: {}]
  %s4 = inlined_call_operand.vmem [shape: bf16[32,96], index: 4, kind: input, shape index: {}]
  %s5 = inlined_call_operand.vmem [shape: f32[1,96], index: 5, kind: input, shape index: {}]
  %s6 = inlined_call_operand.vmem [shape: f32[1,96], index: 6, kind: input, shape index: {}]
  %s7 = inlined_call_operand.vmem [shape: bf16[32,128], index: 7, kind: input, shape index: {}]
  %s8 = inlined_call_operand.vmem [shape: f32[1,128], index: 8, kind: input, shape index: {}]
  %s9 = inlined_call_operand.hbm [shape: f32[4,8,128], index: 9, kind: output, shape index: {0}]
  %s10 = inlined_call_operand.hbm [shape: f32[8,32], index: 10, kind: output, shape index: {1}]
  %11 = xla_tuple %s9, %s10
  %s12 = sld [smem:[#allocation0]]
  $region81: #{tpu_custom_call.1} parent=0
    _
  %s14 = ssub.s32 1, %s12
  %s15 = scalar_select 0, %s14, %s12
  %s16 = sshll.u32 %s0, 4
  %s17 = int_to_ptr.vmem [resolvable:$true] %s16
  %19 = dma.vmem_to_smem %s17, 64, [#allocation4], [#allocation3]
  %20 = dma.done [#allocation3], 64
  %21 = sfence
  $region1: #{tpu_custom_call.1} parent=0
    #allocation5 [shape = 'u8[8192]{0}', space=vmem, size = 0x2000, scoped, tag = 'output window, operand 0']
    #allocation6 [shape = 's32[2]{0}', space=sflag, size = 0x8, scoped, tag = 'scoped memory for tpu_custom_call.1']
    #allocation7 [shape = 'u8[4096]{0}', space=vmem, size = 0x1000, scoped, tag = 'output window, operand 1, single buffered']
    #allocation8 [shape = 's32[1]{0}', space=sflag, size = 0x4, scoped, tag = 'scoped memory for tpu_custom_call.1']
    %22 = vsyncpa [#allocation6], 0
    %s23 = scalar_lea.sflag [#allocation6], 1
    %24 = vsyncpa %s23, 0
    %25 = vsyncpa [#allocation8], 0
    loop: start=0, step=1, limit=6
    $region2: #{tpu_custom_call.1} parent=1 // loop_pre_header
      _
    $region3: #{tpu_custom_call.1} parent=1 // loop_header
      %s27 = sphi 0, %s31
      %p28 = scmp.ge.s32.totalorder %s27, 6
      %s35 = sphi 0, %s35
      %s37 = sphi 0, %s35
      %s38 = sphi 0, %s37
      %s52 = sphi 0, %s38
      %s56 = sphi 0, %s56
      %s58 = sphi 0, %s56
      %s59 = sphi 0, %s58
      %s73 = sphi 0, %s59
      %s77 = sphi 0, %s77
      %s79 = sphi 0, %s77
      %s80 = sphi 0, %s79
      %s94 = sphi 0, %s80
      %s98 = sphi 0, %s98
      %s100 = sphi 0, %s98
      %s101 = sphi 0, %s100
      %s115 = sphi 0, %s101
      %s119 = sphi 0, %s119
      %s121 = sphi 0, %s119
      %s122 = sphi 0, %s121
      %s136 = sphi 0, %s122
      %s140 = sphi 0, %s140
      %s142 = sphi 0, %s140
      %s143 = sphi 0, %s142
      %s157 = sphi 0, %s143
      %s161 = sphi 0, %s161
      %s163 = sphi 0, %s161
      %s164 = sphi 0, %s163
      %s178 = sphi 0, %s164
      %s182 = sphi 0, %s182
      %s184 = sphi 0, %s182
      %s185 = sphi 0, %s184
      %s199 = sphi 0, %s185
      %s205 = sphi 0, %s207
      %s208 = sphi 0, %s205
      %s209 = sphi 0, %s208
      %s225 = sphi 0, %s209
      %s229 = sphi 0, %s229
      %s231 = sphi 0, %s229
      %s232 = sphi 0, %s231
      %s246 = sphi 0, %s232
    $region4: #{tpu_custom_call.1} parent=1 // loop_header_branch
      %30 = sbr.rel (%p28) target = $region8
    $region5: #{tpu_custom_call.1} parent=1 // loop_body
      %s32 = ssub.s32 %s27, 1
      %s33 = ssub.s32 %s27, 2
      %s34 = sadd.s32 %s27, 1
      %s36 = sadd.s32 %s35, 1
      %p39 = scmp.eq.s32.totalorder %s27, 3
      %p40 = scmp.ne.s32.totalorder %s35, %s37
      %p41 = scmp.eq.s32.totalorder %s27, 0
      %p42 = por %p40, %p41
      %p43 = scmp.ne.s32.totalorder %s35, %s37
      %p44 = scmp.eq.s32.totalorder %s32, 3
      %p45 = por %p43, %p44
      %p46 = scmp.ne.s32.totalorder %s37, %s38
      %p47 = scmp.eq.s32.totalorder %s32, 0
      %p48 = por %p46, %p47
      %p49 = scmp.ne.s32.totalorder %s37, %s38
      %p50 = scmp.eq.s32.totalorder %s33, 3
      %p51 = por %p49, %p50
      %p53 = scmp.ne.s32.totalorder %s38, %s52
      %p54 = scmp.eq.s32.totalorder %s33, 0
      %p55 = por %p53, %p54
      %s57 = sadd.s32 %s56, 1
      %p60 = scmp.eq.s32.totalorder %s27, 3
      %p61 = scmp.ne.s32.totalorder %s56, %s58
      %p62 = scmp.eq.s32.totalorder %s27, 0
      %p63 = por %p61, %p62
      %p64 = scmp.ne.s32.totalorder %s56, %s58
      %p65 = scmp.eq.s32.totalorder %s32, 3
      %p66 = por %p64, %p65
      %p67 = scmp.ne.s32.totalorder %s58, %s59
      %p68 = scmp.eq.s32.totalorder %s32, 0
      %p69 = por %p67, %p68
      %p70 = scmp.ne.s32.totalorder %s58, %s59
      %p71 = scmp.eq.s32.totalorder %s33, 3
      %p72 = por %p70, %p71
      %p74 = scmp.ne.s32.totalorder %s59, %s73
      %p75 = scmp.eq.s32.totalorder %s33, 0
      %p76 = por %p74, %p75
      %s78 = sadd.s32 %s77, 1
      %p81 = scmp.eq.s32.totalorder %s27, 3
      %p82 = scmp.ne.s32.totalorder %s77, %s79
      %p83 = scmp.eq.s32.totalorder %s27, 0
      %p84 = por %p82, %p83
      %p85 = scmp.ne.s32.totalorder %s77, %s79
      %p86 = scmp.eq.s32.totalorder %s32, 3
      %p87 = por %p85, %p86
      %p88 = scmp.ne.s32.totalorder %s79, %s80
      %p89 = scmp.eq.s32.totalorder %s32, 0
      %p90 = por %p88, %p89
      %p91 = scmp.ne.s32.totalorder %s79, %s80
      %p92 = scmp.eq.s32.totalorder %s33, 3
      %p93 = por %p91, %p92
      %p95 = scmp.ne.s32.totalorder %s80, %s94
      %p96 = scmp.eq.s32.totalorder %s33, 0
      %p97 = por %p95, %p96
      %s99 = sadd.s32 %s98, 1
      %p102 = scmp.eq.s32.totalorder %s27, 3
      %p103 = scmp.ne.s32.totalorder %s98, %s100
      %p104 = scmp.eq.s32.totalorder %s27, 0
      %p105 = por %p103, %p104
      %p106 = scmp.ne.s32.totalorder %s98, %s100
      %p107 = scmp.eq.s32.totalorder %s32, 3
      %p108 = por %p106, %p107
      %p109 = scmp.ne.s32.totalorder %s100, %s101
      %p110 = scmp.eq.s32.totalorder %s32, 0
      %p111 = por %p109, %p110
      %p112 = scmp.ne.s32.totalorder %s100, %s101
      %p113 = scmp.eq.s32.totalorder %s33, 3
      %p114 = por %p112, %p113
      %p116 = scmp.ne.s32.totalorder %s101, %s115
      %p117 = scmp.eq.s32.totalorder %s33, 0
      %p118 = por %p116, %p117
      %s120 = sadd.s32 %s119, 1
      %p123 = scmp.eq.s32.totalorder %s27, 3
      %p124 = scmp.ne.s32.totalorder %s119, %s121
      %p125 = scmp.eq.s32.totalorder %s27, 0
      %p126 = por %p124, %p125
      %p127 = scmp.ne.s32.totalorder %s119, %s121
      %p128 = scmp.eq.s32.totalorder %s32, 3
      %p129 = por %p127, %p128
      %p130 = scmp.ne.s32.totalorder %s121, %s122
      %p131 = scmp.eq.s32.totalorder %s32, 0
      %p132 = por %p130, %p131
      %p133 = scmp.ne.s32.totalorder %s121, %s122
      %p134 = scmp.eq.s32.totalorder %s33, 3
      %p135 = por %p133, %p134
      %p137 = scmp.ne.s32.totalorder %s122, %s136
      %p138 = scmp.eq.s32.totalorder %s33, 0
      %p139 = por %p137, %p138
      %s141 = sadd.s32 %s140, 1
      %p144 = scmp.eq.s32.totalorder %s27, 3
      %p145 = scmp.ne.s32.totalorder %s140, %s142
      %p146 = scmp.eq.s32.totalorder %s27, 0
      %p147 = por %p145, %p146
      %p148 = scmp.ne.s32.totalorder %s140, %s142
      %p149 = scmp.eq.s32.totalorder %s32, 3
      %p150 = por %p148, %p149
      %p151 = scmp.ne.s32.totalorder %s142, %s143
      %p152 = scmp.eq.s32.totalorder %s32, 0
      %p153 = por %p151, %p152
      %p154 = scmp.ne.s32.totalorder %s142, %s143
      %p155 = scmp.eq.s32.totalorder %s33, 3
      %p156 = por %p154, %p155
      %p158 = scmp.ne.s32.totalorder %s143, %s157
      %p159 = scmp.eq.s32.totalorder %s33, 0
      %p160 = por %p158, %p159
      %s162 = sadd.s32 %s161, 1
      %p165 = scmp.eq.s32.totalorder %s27, 3
      %p166 = scmp.ne.s32.totalorder %s161, %s163
      %p167 = scmp.eq.s32.totalorder %s27, 0
      %p168 = por %p166, %p167
      %p169 = scmp.ne.s32.totalorder %s161, %s163
      %p170 = scmp.eq.s32.totalorder %s32, 3
      %p171 = por %p169, %p170
      %p172 = scmp.ne.s32.totalorder %s163, %s164
      %p173 = scmp.eq.s32.totalorder %s32, 0
      %p174 = por %p172, %p173
      %p175 = scmp.ne.s32.totalorder %s163, %s164
      %p176 = scmp.eq.s32.totalorder %s33, 3
      %p177 = por %p175, %p176
      %p179 = scmp.ne.s32.totalorder %s164, %s178
      %p180 = scmp.eq.s32.totalorder %s33, 0
      %p181 = por %p179, %p180
      %s183 = sadd.s32 %s182, 1
      %p186 = scmp.eq.s32.totalorder %s27, 3
      %p187 = scmp.ne.s32.totalorder %s182, %s184
      %p188 = scmp.eq.s32.totalorder %s27, 0
      %p189 = por %p187, %p188
      %p190 = scmp.ne.s32.totalorder %s182, %s184
      %p191 = scmp.eq.s32.totalorder %s32, 3
      %p192 = por %p190, %p191
      %p193 = scmp.ne.s32.totalorder %s184, %s185
      %p194 = scmp.eq.s32.totalorder %s32, 0
      %p195 = por %p193, %p194
      %p196 = scmp.ne.s32.totalorder %s184, %s185
      %p197 = scmp.eq.s32.totalorder %s33, 3
      %p198 = por %p196, %p197
      %p200 = scmp.ne.s32.totalorder %s185, %s199
      %p201 = scmp.eq.s32.totalorder %s33, 0
      %p202 = por %p200, %p201
      %s203 = ssub.s32 %s27, %s34
      %p204 = scmp.eq.s32.totalorder %s203, 0
      %s206 = sadd.s32 %s205, 1
      %s207 = scalar_select %p204, %s205, %s206
      %p210 = pneg %p204
      %p211 = scmp.eq.s32.totalorder %s27, 3
      %p212 = por %p210, %p211
      %p213 = scmp.ne.s32.totalorder %s205, %s208
      %p214 = scmp.eq.s32.totalorder %s27, 0
      %p215 = por %p213, %p214
      %p216 = scmp.ne.s32.totalorder %s205, %s208
      %p217 = scmp.eq.s32.totalorder %s32, 3
      %p218 = por %p216, %p217
      %p219 = scmp.ne.s32.totalorder %s208, %s209
      %p220 = scmp.eq.s32.totalorder %s32, 0
      %p221 = por %p219, %p220
      %p222 = scmp.ne.s32.totalorder %s208, %s209
      %p223 = scmp.eq.s32.totalorder %s33, 3
      %p224 = por %p222, %p223
      %p226 = scmp.ne.s32.totalorder %s209, %s225
      %p227 = scmp.eq.s32.totalorder %s33, 0
      %p228 = por %p226, %p227
      %s230 = sadd.s32 %s229, 1
      %p233 = scmp.eq.s32.totalorder %s27, 3
      %p234 = scmp.ne.s32.totalorder %s229, %s231
      %p235 = scmp.eq.s32.totalorder %s27, 0
      %p236 = por %p234, %p235
      %p237 = scmp.ne.s32.totalorder %s229, %s231
      %p238 = scmp.eq.s32.totalorder %s32, 3
      %p239 = por %p237, %p238
      %p240 = scmp.ne.s32.totalorder %s231, %s232
      %p241 = scmp.eq.s32.totalorder %s32, 0
      %p242 = por %p240, %p241
      %p243 = scmp.ne.s32.totalorder %s231, %s232
      %p244 = scmp.eq.s32.totalorder %s33, 3
      %p245 = por %p243, %p244
      %p247 = scmp.ne.s32.totalorder %s232, %s246
      %p248 = scmp.eq.s32.totalorder %s33, 0
      %p249 = por %p247, %p248
      %p250 = scmp.le.s32.totalorder 1, %s27
      %p251 = scmp.lt.s32.totalorder %s27, 5
      %p252 = pnand %p250, %p251
      %p253 = pneg %p252
      // Predicated region
      $region9: #{tpu_custom_call.1} parent=5 // pred_check
        _
      $region10: #{tpu_custom_call.1} parent=5 // pred_check_branch
        %255 = sbr.rel (%p252) target = $region12
      $region11: #{tpu_custom_call.1} parent=5 // pred_region
        %s256 = ssub.s32 %s27, 1
        // Predicated region
        $region13: #{tpu_custom_call.1} parent=11 // pred_check
          %p257 = pneg %p48
        $region14: #{tpu_custom_call.1} parent=11 // pred_check_branch
          %259 = sbr.rel (%p257) target = $region16
        $region15: #{tpu_custom_call.1} parent=11 // pred_region
          _
        $region16: #{tpu_custom_call.1} parent=11 // pred_fallthru
          _
        // Predicated region
        $region17: #{tpu_custom_call.1} parent=11 // pred_check
          %p260 = pneg %p69
        $region18: #{tpu_custom_call.1} parent=11 // pred_check_branch
          %262 = sbr.rel (%p260) target = $region20
        $region19: #{tpu_custom_call.1} parent=11 // pred_region
          _
        $region20: #{tpu_custom_call.1} parent=11 // pred_fallthru
          _
        // Predicated region
        $region21: #{tpu_custom_call.1} parent=11 // pred_check
          %p263 = pneg %p90
        $region22: #{tpu_custom_call.1} parent=11 // pred_check_branch
          %265 = sbr.rel (%p263) target = $region24
        $region23: #{tpu_custom_call.1} parent=11 // pred_region
          _
        $region24: #{tpu_custom_call.1} parent=11 // pred_fallthru
          _
        // Predicated region
        $region25: #{tpu_custom_call.1} parent=11 // pred_check
          %p266 = pneg %p111
        $region26: #{tpu_custom_call.1} parent=11 // pred_check_branch
          %268 = sbr.rel (%p266) target = $region28
        $region27: #{tpu_custom_call.1} parent=11 // pred_region
          _
        $region28: #{tpu_custom_call.1} parent=11 // pred_fallthru
          _
        // Predicated region
        $region29: #{tpu_custom_call.1} parent=11 // pred_check
          %p269 = pneg %p132
        $region30: #{tpu_custom_call.1} parent=11 // pred_check_branch
          %271 = sbr.rel (%p269) target = $region32
        $region31: #{tpu_custom_call.1} parent=11 // pred_region
          _
        $region32: #{tpu_custom_call.1} parent=11 // pred_fallthru
          _
        // Predicated region
        $region33: #{tpu_custom_call.1} parent=11 // pred_check
          %p272 = pneg %p153
        $region34: #{tpu_custom_call.1} parent=11 // pred_check_branch
          %274 = sbr.rel (%p272) target = $region36
        $region35: #{tpu_custom_call.1} parent=11 // pred_region
          _
        $region36: #{tpu_custom_call.1} parent=11 // pred_fallthru
          _
        // Predicated region
        $region37: #{tpu_custom_call.1} parent=11 // pred_check
          %p275 = pneg %p174
        $region38: #{tpu_custom_call.1} parent=11 // pred_check_branch
          %277 = sbr.rel (%p275) target = $region40
        $region39: #{tpu_custom_call.1} parent=11 // pred_region
          _
        $region40: #{tpu_custom_call.1} parent=11 // pred_fallthru
          _
        // Predicated region
        $region41: #{tpu_custom_call.1} parent=11 // pred_check
          %p278 = pneg %p195
        $region42: #{tpu_custom_call.1} parent=11 // pred_check_branch
          %280 = sbr.rel (%p278) target = $region44
        $region43: #{tpu_custom_call.1} parent=11 // pred_region
          _
        $region44: #{tpu_custom_call.1} parent=11 // pred_fallthru
          _
      $region12: #{tpu_custom_call.1} parent=5 // pred_fallthru
        _
      %p281 = scmp.lt.s32.totalorder %s27, 4
      // Predicated region
      $region45: #{tpu_custom_call.1} parent=5 // pred_check
        %p282 = pneg %p281
      $region46: #{tpu_custom_call.1} parent=5 // pred_check_branch
        %284 = sbr.rel (%p282) target = $region48
      $region47: #{tpu_custom_call.1} parent=5 // pred_region
        _
      $region48: #{tpu_custom_call.1} parent=5 // pred_fallthru
        _
      %p285 = scmp.le.s32.totalorder 1, %s27
      %p286 = scmp.lt.s32.totalorder %s27, 5
      %p287 = pnand %p285, %p286
      %p288 = pneg %p287
      // Predicated region
      $region49: #{tpu_custom_call.1} parent=5 // pred_check
        _
      $region50: #{tpu_custom_call.1} parent=5 // pred_check_branch
        %290 = sbr.rel (%p287) target = $region52
      $region51: #{tpu_custom_call.1} parent=5 // pred_region
        %s291 = ssub.s32 %s27, 1
        %p292 = pneg %p48
        %p293 = pneg %p45
        %p294 = pneg %p69
        %p295 = pneg %p66
        %p296 = pneg %p90
        %p297 = pneg %p87
        %p298 = pneg %p111
        %p299 = pneg %p108
        %p300 = pneg %p132
        %p301 = pneg %p129
        %p302 = pneg %p153
        %p303 = pneg %p150
        %p304 = pneg %p174
        %p305 = pneg %p171
        %p306 = pneg %p195
        %p307 = pneg %p192
        %p308 = pneg %p221
        %p309 = pneg %p218
        %s310 = sand.u32 %s208, 1
        %s311 = scalar_lea.sflag [#allocation6], %s310
        %s312 = sand.u32 %s208, 1
        %s313 = smul.addr %s312, 8
        %s314 = scalar_lea.vmem [#allocation5], %s313
        %p315 = pneg %p242
        %p316 = pneg %p239
        %p318 = scmp.eq.s32.totalorder %s32, 0
        // Predicated region
        $region53: #{tpu_custom_call.1} parent=51 // pred_check
          %p319 = pneg %p318
        $region54: #{tpu_custom_call.1} parent=51 // pred_check_branch
          %321 = sbr.rel (%p319) target = $region56
        $region55: #{tpu_custom_call.1} parent=51 // pred_region
          %v322 = vld [vmem:[%s2] sm:$0xff]
          %vm323 = vcmask 261120
          %324 = vst.msk [vmem:[#allocation2] sm:$0xff] %vm323, %v322
        $region56: #{tpu_custom_call.1} parent=51 // pred_fallthru
          _
        %v325 = vlaneseq
        %v326 = vshrl.u32 %v325, 7
        %vm327 = vcmp.eq.s32.totalorder %v326, 0
        %s328 = smul.u32 %s32, 128
        %s329 = sld [smem:[#allocation4 + %s328]]
        %v330 = vstv %s329
        %v331 = vsel %vm327, %v330, 0
        %vm332 = vcmp.eq.s32.totalorder %v326, 1
        %s333 = sadd.s32 %s328, 1
        %s334 = sld [smem:[#allocation4 + %s333]]
        %v335 = vstv %s334
        %v336 = vsel %vm332, %v335, %v331
        %vm337 = vcmp.eq.s32.totalorder %v326, 2
        %s338 = sadd.s32 %s328, 2
        %s339 = sld [smem:[#allocation4 + %s338]]
        %v340 = vstv %s339
        %v341 = vsel %vm337, %v340, %v336
        %vm342 = vcmp.eq.s32.totalorder %v326, 3
        %s343 = sadd.s32 %s328, 3
        %s344 = sld [smem:[#allocation4 + %s343]]
        %v345 = vstv %s344
        %v346 = vsel %vm342, %v345, %v341
        %vm347 = vcmp.eq.s32.totalorder %v326, 4
        %s348 = sadd.s32 %s328, 4
        %s349 = sld [smem:[#allocation4 + %s348]]
        %v350 = vstv %s349
        %v351 = vsel %vm347, %v350, %v346
        %vm352 = vcmp.eq.s32.totalorder %v326, 5
        %s353 = sadd.s32 %s328, 5
        %s354 = sld [smem:[#allocation4 + %s353]]
        %v355 = vstv %s354
        %v356 = vsel %vm352, %v355, %v351
        %vm357 = vcmp.eq.s32.totalorder %v326, 6
        %s358 = sadd.s32 %s328, 6
        %s359 = sld [smem:[#allocation4 + %s358]]
        %v360 = vstv %s359
        %v361 = vsel %vm357, %v360, %v356
        %vm362 = vcmp.eq.s32.totalorder %v326, 7
        %s363 = sadd.s32 %s328, 7
        %s364 = sld [smem:[#allocation4 + %s363]]
        %v365 = vstv %s364
        %v366 = vsel %vm362, %v365, %v361
        %v367 = vlaneseq
        %v368 = vand.u32 %v367, 127
        %vm369 = vcmp.eq.s32.totalorder %v368, %v366
        %v370 = vsel %vm369, 1, 0
        %v371 = vcvt.s32.f32 %v370
        %v372 = vpack.c.bf16 %v371, %v371
        %v373 = vld [vmem:[%s1] sm:$0xf]
        %v374 = vld [vmem:[%s1 + $0x4] sm:$0xf]
        %v375 = vld [vmem:[%s1 + $0x8] sm:$0xf]
        %v376 = vld [vmem:[%s1 + $0xc] sm:$0xf]
        %v377 = vld [vmem:[%s1 + $0x10] sm:$0xf]
        %v378 = vld [vmem:[%s1 + $0x14] sm:$0xf]
        %v379 = vld [vmem:[%s1 + $0x18] sm:$0xf]
        %v380 = vld [vmem:[%s1 + $0x1c] sm:$0xf]
        %v381 = vld [vmem:[%s1 + $0x20] sm:$0xf]
        %v382 = vld [vmem:[%s1 + $0x24] sm:$0xf]
        %v383 = vld [vmem:[%s1 + $0x28] sm:$0xf]
        %v384 = vld [vmem:[%s1 + $0x2c] sm:$0xf]
        %v385 = vld [vmem:[%s1 + $0x30] sm:$0xf]
        %v386 = vld [vmem:[%s1 + $0x34] sm:$0xf]
        %v387 = vld [vmem:[%s1 + $0x38] sm:$0xf]
        %v388 = vld [vmem:[%s1 + $0x3c] sm:$0xf]
        %v405 = vunpack.c.l.b16 %v373
        %v406 = vunpack.c.l.b16 %v374
        %v407 = vunpack.c.l.b16 %v375
        %v408 = vunpack.c.l.b16 %v376
        %v409 = vunpack.c.l.b16 %v377
        %v410 = vunpack.c.l.b16 %v378
        %v411 = vunpack.c.l.b16 %v379
        %v412 = vunpack.c.l.b16 %v380
        %v413 = vunpack.c.l.b16 %v381
        %v414 = vunpack.c.l.b16 %v382
        %v415 = vunpack.c.l.b16 %v383
        %v416 = vunpack.c.l.b16 %v384
        %v417 = vunpack.c.l.b16 %v385
        %v418 = vunpack.c.l.b16 %v386
        %v419 = vunpack.c.l.b16 %v387
        %v420 = vunpack.c.l.b16 %v388
        %v421 = vpack.c.b16 %v406, %v405
        %v422 = vpack.c.b16 %v408, %v407
        %v423 = vpack.c.b16 %v410, %v409
        %v424 = vpack.c.b16 %v412, %v411
        %v425 = vpack.c.b16 %v414, %v413
        %v426 = vpack.c.b16 %v416, %v415
        %v427 = vpack.c.b16 %v418, %v417
        %v428 = vpack.c.b16 %v420, %v419
        %437 = vmatprep.subr.bf16.mxu0 0
        %438 = vmatpush1.bf16.msra.mxu0 %v428
        %439 = vmatprep.subr.bf16.mxu0 0
        %440 = vmatpush1.bf16.msra.mxu0 %v427
        %441 = vmatprep.subr.bf16.mxu0 0
        %442 = vmatpush1.bf16.msra.mxu0 %v426
        %443 = vmatprep.subr.bf16.mxu0 0
        %444 = vmatpush1.bf16.msra.mxu0 %v425
        %445 = vmatprep.subr.bf16.mxu0 0
        %446 = vmatpush1.bf16.msra.mxu0 %v424
        %447 = vmatprep.subr.bf16.mxu0 0
        %448 = vmatpush1.bf16.msra.mxu0 %v423
        %449 = vmatprep.subr.bf16.mxu0 0
        %450 = vmatpush1.bf16.msra.mxu0 %v422
        %451 = vmatprep.subr.bf16.mxu0 0
        %452 = vmatpush1.bf16.msra.mxu0 %v421
        %453 = vmatprep.subr.bf16.mxu0 0
        %454 = vmatpush2.bf16.msra.mxu0 0
        %455 = vmatprep.subr.bf16.mxu0 0
        %456 = vmatpush2.bf16.msra.mxu0 0
        %457 = vmatprep.subr.bf16.mxu0 0
        %458 = vmatpush2.bf16.msra.mxu0 0
        %459 = vmatprep.subr.bf16.mxu0 0
        %460 = vmatpush2.bf16.msra.mxu0 0
        %461 = vmatprep.subr.bf16.mxu0 0
        %462 = vmatpush2.bf16.msra.mxu0 0
        %463 = vmatprep.subr.bf16.mxu0 0
        %464 = vmatpush2.bf16.msra.mxu0 0
        %465 = vmatprep.subr.bf16.mxu0 0
        %466 = vmatpush2.bf16.msra.mxu0 0
        %467 = vmatprep.subr.bf16.mxu0 0
        %468 = vmatpush2.bf16.msra.mxu0 0
        %469 = vmatprep.mubr.bf16.mxu0 0
        %470 = vmatmul.mubr.bf16.gmra.mxu0 %v372
        %v471 = vpop.f32.mrf.mxu0
        %v472 = vadd.f32 0.0, %v471
        %v473 = vpop.f32.mrf.mxu0
        %v474 = vpop.f32.mrf.mxu0
        %v475 = vpop.f32.mrf.mxu0
        %476 = vdwg.mxu0
        %v477 = vmax.f32 %v472, 0.0
        %v478 = vld [vmem:[#allocation2] sm:$0xff]
        %v479 = vpack.c.bf16 %v477, %v477
        %v480 = vld [vmem:[%s3] sm:$0xf]
        %v481 = vld [vmem:[%s3 + $0x4] sm:$0xf]
        %v482 = vld [vmem:[%s3 + $0x8] sm:$0xf]
        %v483 = vld [vmem:[%s3 + $0xc] sm:$0xf]
        %v484 = vld [vmem:[%s5] sm:$0x1]
        %v486 = vlaneseq
        %v487 = vshrl.u32 %v486, 7
        %v488 = vsub.s32 0, %v487
        %v489 = vrot.slane %v484, %v488
        %v495 = vunpack.c.l.b16 %v480
        %v496 = vunpack.c.l.b16 %v481
        %v497 = vunpack.c.l.b16 %v482
        %v498 = vunpack.c.l.b16 %v483
        %v499 = vpack.c.b16 %v496, %v495
        %v500 = vpack.c.b16 %v498, %v497
        %vm503 = vcmask 261120
        %v505 = vsel %vm503, %v479, 0
        %507 = vmatprep.subr.bf16.mxu0 0
        %508 = vmatpush1.bf16.msra.mxu0 0
        %509 = vmatprep.subr.bf16.mxu0 0
        %510 = vmatpush1.bf16.msra.mxu0 0
        %511 = vmatprep.subr.bf16.mxu0 0
        %512 = vmatpush1.bf16.msra.mxu0 0
        %513 = vmatprep.subr.bf16.mxu0 0
        %514 = vmatpush1.bf16.msra.mxu0 0
        %515 = vmatprep.subr.bf16.mxu0 0
        %516 = vmatpush1.bf16.msra.mxu0 0
        %517 = vmatprep.subr.bf16.mxu0 0
        %518 = vmatpush1.bf16.msra.mxu0 0
        %519 = vmatprep.subr.bf16.mxu0 0
        %520 = vmatpush1.bf16.msra.mxu0 %v500
        %521 = vmatprep.subr.bf16.mxu0 0
        %522 = vmatpush1.bf16.msra.mxu0 %v499
        %523 = vmatprep.subr.bf16.mxu0 0
        %524 = vmatpush2.bf16.msra.mxu0 0
        %525 = vmatprep.subr.bf16.mxu0 0
        %526 = vmatpush2.bf16.msra.mxu0 0
        %527 = vmatprep.subr.bf16.mxu0 0
        %528 = vmatpush2.bf16.msra.mxu0 0
        %529 = vmatprep.subr.bf16.mxu0 0
        %530 = vmatpush2.bf16.msra.mxu0 0
        %531 = vmatprep.subr.bf16.mxu0 0
        %532 = vmatpush2.bf16.msra.mxu0 0
        %533 = vmatprep.subr.bf16.mxu0 0
        %534 = vmatpush2.bf16.msra.mxu0 0
        %535 = vmatprep.subr.bf16.mxu0 0
        %536 = vmatpush2.bf16.msra.mxu0 0
        %537 = vmatprep.subr.bf16.mxu0 0
        %538 = vmatpush2.bf16.msra.mxu0 0
        %539 = vmatprep.mubr.bf16.mxu0 0
        %540 = vmatmul.mubr.bf16.gmra.mxu0 %v505
        %v541 = vpop.f32.mrf.mxu0
        %v542 = vadd.f32 %v489, %v541
        %v543 = vpop.f32.mrf.mxu0
        %v544 = vpop.f32.mrf.mxu0
        %v545 = vpop.f32.mrf.mxu0
        %546 = vdwg.mxu0
        %v547 = vpack.c.bf16 %v478, %v478
        %v548 = vld [vmem:[%s4] sm:$0xf]
        %v549 = vld [vmem:[%s4 + $0x4] sm:$0xf]
        %v550 = vld [vmem:[%s4 + $0x8] sm:$0xf]
        %v551 = vld [vmem:[%s4 + $0xc] sm:$0xf]
        %v552 = vld [vmem:[%s6] sm:$0x1]
        %v554 = vlaneseq
        %v555 = vshrl.u32 %v554, 7
        %v556 = vsub.s32 0, %v555
        %v557 = vrot.slane %v552, %v556
        %v563 = vunpack.c.l.b16 %v548
        %v564 = vunpack.c.l.b16 %v549
        %v565 = vunpack.c.l.b16 %v550
        %v566 = vunpack.c.l.b16 %v551
        %v567 = vpack.c.b16 %v564, %v563
        %v568 = vpack.c.b16 %v566, %v565
        %v572 = vsel %vm503, %v547, 0
        %574 = vmatprep.subr.bf16.mxu0 0
        %575 = vmatpush1.bf16.msra.mxu0 0
        %576 = vmatprep.subr.bf16.mxu0 0
        %577 = vmatpush1.bf16.msra.mxu0 0
        %578 = vmatprep.subr.bf16.mxu0 0
        %579 = vmatpush1.bf16.msra.mxu0 0
        %580 = vmatprep.subr.bf16.mxu0 0
        %581 = vmatpush1.bf16.msra.mxu0 0
        %582 = vmatprep.subr.bf16.mxu0 0
        %583 = vmatpush1.bf16.msra.mxu0 0
        %584 = vmatprep.subr.bf16.mxu0 0
        %585 = vmatpush1.bf16.msra.mxu0 0
        %586 = vmatprep.subr.bf16.mxu0 0
        %587 = vmatpush1.bf16.msra.mxu0 %v568
        %588 = vmatprep.subr.bf16.mxu0 0
        %589 = vmatpush1.bf16.msra.mxu0 %v567
        %590 = vmatprep.subr.bf16.mxu0 0
        %591 = vmatpush2.bf16.msra.mxu0 0
        %592 = vmatprep.subr.bf16.mxu0 0
        %593 = vmatpush2.bf16.msra.mxu0 0
        %594 = vmatprep.subr.bf16.mxu0 0
        %595 = vmatpush2.bf16.msra.mxu0 0
        %596 = vmatprep.subr.bf16.mxu0 0
        %597 = vmatpush2.bf16.msra.mxu0 0
        %598 = vmatprep.subr.bf16.mxu0 0
        %599 = vmatpush2.bf16.msra.mxu0 0
        %600 = vmatprep.subr.bf16.mxu0 0
        %601 = vmatpush2.bf16.msra.mxu0 0
        %602 = vmatprep.subr.bf16.mxu0 0
        %603 = vmatpush2.bf16.msra.mxu0 0
        %604 = vmatprep.subr.bf16.mxu0 0
        %605 = vmatpush2.bf16.msra.mxu0 0
        %606 = vmatprep.mubr.bf16.mxu0 0
        %607 = vmatmul.mubr.bf16.gmra.mxu0 %v572
        %v608 = vpop.f32.mrf.mxu0
        %v609 = vadd.f32 %v557, %v608
        %v610 = vpop.f32.mrf.mxu0
        %v611 = vpop.f32.mrf.mxu0
        %v612 = vpop.f32.mrf.mxu0
        %613 = vdwg.mxu0
        %v614 = vadd.f32 %v542, %v609
        %v615 = vxor.u32 %v614, 2147483648
        %v616 = vmul.f32 %v615, 1.442695
        %v617 = vpow.pop %v616
        %v618 = vadd.f32 %v617, 1.0
        %v619 = vrcp.pop %v618
        %v620 = vmul.f32 1.0, %v619
        %622 = vrot.lane.b32.xlu0 %v609, 64
        %v623 = vpop.permute.xlu0 %622
        %v625 = vmul.f32 %v620, %v623
        %627 = vrot.lane.b32.xlu0 %v625, 64
        %v628 = vpop.permute.xlu0 %627
        %v630 = vadd.f32 %v542, %v628
        %v631 = vtanh.pop %v630
        %v632 = vsub.f32 1.0, %v620
        %634 = vrot.lane.b32.xlu0 %v631, 96
        %v635 = vpop.permute.xlu0 %634
        %v637 = vmul.f32 %v632, %v635
        %639 = vrot.lane.b32.xlu0 %v478, 32
        %v640 = vpop.permute.xlu0 %639
        %v642 = vmul.f32 %v620, %v640
        %v643 = vadd.f32 %v637, %v642
        %645 = vrot.lane.b32.xlu0 %v643, 96
        %v646 = vpop.permute.xlu0 %645
        %648 = vst.msk [vmem:[#allocation2] sm:$0xff] %vm503, %v646
        %v649 = vpack.c.bf16 %v643, %v643
        %v650 = vld [vmem:[%s7] sm:$0xf]
        %v651 = vld [vmem:[%s7 + $0x4] sm:$0xf]
        %v652 = vld [vmem:[%s7 + $0x8] sm:$0xf]
        %v653 = vld [vmem:[%s7 + $0xc] sm:$0xf]
        %v654 = vld [vmem:[%s8] sm:$0x1]
        %v656 = vlaneseq
        %v657 = vshrl.u32 %v656, 7
        %v658 = vsub.s32 0, %v657
        %v659 = vrot.slane %v654, %v658
        %662 = vrot.lane.b32.xlu0 %v649, 96
        %v663 = vpop.permute.xlu0 %662
        %v668 = vunpack.c.l.b16 %v650
        %v669 = vunpack.c.l.b16 %v651
        %v670 = vunpack.c.l.b16 %v652
        %v671 = vunpack.c.l.b16 %v653
        %v672 = vpack.c.b16 %v669, %v668
        %v673 = vpack.c.b16 %v671, %v670
        %v677 = vsel %vm503, %v663, 0
        %679 = vmatprep.subr.bf16.mxu0 0
        %680 = vmatpush1.bf16.msra.mxu0 0
        %681 = vmatprep.subr.bf16.mxu0 0
        %682 = vmatpush1.bf16.msra.mxu0 0
        %683 = vmatprep.subr.bf16.mxu0 0
        %684 = vmatpush1.bf16.msra.mxu0 0
        %685 = vmatprep.subr.bf16.mxu0 0
        %686 = vmatpush1.bf16.msra.mxu0 0
        %687 = vmatprep.subr.bf16.mxu0 0
        %688 = vmatpush1.bf16.msra.mxu0 0
        %689 = vmatprep.subr.bf16.mxu0 0
        %690 = vmatpush1.bf16.msra.mxu0 0
        %691 = vmatprep.subr.bf16.mxu0 0
        %692 = vmatpush1.bf16.msra.mxu0 %v673
        %693 = vmatprep.subr.bf16.mxu0 0
        %694 = vmatpush1.bf16.msra.mxu0 %v672
        %695 = vmatprep.subr.bf16.mxu0 0
        %696 = vmatpush2.bf16.msra.mxu0 0
        %697 = vmatprep.subr.bf16.mxu0 0
        %698 = vmatpush2.bf16.msra.mxu0 0
        %699 = vmatprep.subr.bf16.mxu0 0
        %700 = vmatpush2.bf16.msra.mxu0 0
        %701 = vmatprep.subr.bf16.mxu0 0
        %702 = vmatpush2.bf16.msra.mxu0 0
        %703 = vmatprep.subr.bf16.mxu0 0
        %704 = vmatpush2.bf16.msra.mxu0 0
        %705 = vmatprep.subr.bf16.mxu0 0
        %706 = vmatpush2.bf16.msra.mxu0 0
        %707 = vmatprep.subr.bf16.mxu0 0
        %708 = vmatpush2.bf16.msra.mxu0 0
        %709 = vmatprep.subr.bf16.mxu0 0
        %710 = vmatpush2.bf16.msra.mxu0 0
        %711 = vmatprep.mubr.bf16.mxu0 0
        %712 = vmatmul.mubr.bf16.gmra.mxu0 %v677
        %v713 = vpop.f32.mrf.mxu0
        %v714 = vadd.f32 %v659, %v713
        %v715 = vpop.f32.mrf.mxu0
        %v716 = vpop.f32.mrf.mxu0
        %v717 = vpop.f32.mrf.mxu0
        %718 = vdwg.mxu0
        %719 = vmax.xlane.f32.xlu0 %v714
        %v720 = vpop.xlane.xlu0 %719
        %v721 = vsub.f32 %v714, %v720
        %v722 = vmul.f32 %v721, 1.442695
        %v723 = vpow.pop %v722
        %724 = vadd.xlane.f32.xlu0 %v723
        %v725 = vpop.xlane.xlu0 %724
        %v726 = vlog2.pop %v725
        %v727 = vmul.f32 %v726, 0.6931472
        %v728 = vsub.f32 %v721, %v727
        %729 = vst [vmem:[%s314] sm:$0xff] %v728
        %p730 = scmp.eq.s32.totalorder %s32, 3
        // Predicated region
        $region57: #{tpu_custom_call.1} parent=51 // pred_check
          %p731 = pneg %p730
        $region58: #{tpu_custom_call.1} parent=51 // pred_check_branch
          %733 = sbr.rel (%p731) target = $region60
        $region59: #{tpu_custom_call.1} parent=51 // pred_region
          %734 = vst.msk [vmem:[#allocation7] sm:$0xff] %vm503, %v646
        $region60: #{tpu_custom_call.1} parent=51 // pred_fallthru
          _
        %s735 = sand.u32 %s208, 1
        %s736 = scalar_lea.sflag [#allocation6], %s735
        %s737 = sand.u32 %s208, 1
        %s738 = smul.addr %s737, 8
        %s739 = scalar_lea.vmem [#allocation5], %s738
        // Predicated region
        $region61: #{tpu_custom_call.1} parent=51 // pred_check
          %p740 = pneg %p218
        $region62: #{tpu_custom_call.1} parent=51 // pred_check_branch
          %742 = sbr.rel (%p740) target = $region64
        $region63: #{tpu_custom_call.1} parent=51 // pred_region
          %s744 = ssub.s32 128, 128
          %745 = vsyncadd %s736, %s744
          %s746 = smul.addr %s32, 128
          %s747 = scalar_lea.hbm %s9, %s746
          %s749 = sshll.u32 %s739, 4
          %s750 = int_to_ptr.vmem [resolvable:$true] %s749
          %752 = dma.vmem_to_hbm [thread:$0]  %s750, 128, %s747, %s736
        $region64: #{tpu_custom_call.1} parent=51 // pred_fallthru
          _
        // Predicated region
        $region65: #{tpu_custom_call.1} parent=51 // pred_check
          %p753 = pneg %p239
        $region66: #{tpu_custom_call.1} parent=51 // pred_check_branch
          %755 = sbr.rel (%p753) target = $region68
        $region67: #{tpu_custom_call.1} parent=51 // pred_region
          %s757 = ssub.s32 128, 128
          %758 = vsyncadd [#allocation8], %s757
          %s760 = sshll.u32 [#allocation7], 4
          %s761 = int_to_ptr.vmem [resolvable:$true] %s760
          %763 = dma.vmem_to_hbm [thread:$0]  %s761, 128, %s10, [#allocation8]
        $region68: #{tpu_custom_call.1} parent=51 // pred_fallthru
          _
        // Predicated region
        $region69: #{tpu_custom_call.1} parent=51 // pred_check
          %p764 = pneg %p239
        $region70: #{tpu_custom_call.1} parent=51 // pred_check_branch
          %766 = sbr.rel (%p764) target = $region72
        $region71: #{tpu_custom_call.1} parent=51 // pred_region
          %767 = dma.done [#allocation8], 128
        $region72: #{tpu_custom_call.1} parent=51 // pred_fallthru
          _
      $region52: #{tpu_custom_call.1} parent=5 // pred_fallthru
        _
      %p768 = scmp.le.s32.totalorder 2, %s27
      // Predicated region
      $region73: #{tpu_custom_call.1} parent=5 // pred_check
        %p769 = pneg %p768
      $region74: #{tpu_custom_call.1} parent=5 // pred_check_branch
        %771 = sbr.rel (%p769) target = $region76
      $region75: #{tpu_custom_call.1} parent=5 // pred_region
        %s772 = ssub.s32 %s27, 2
        // Predicated region
        $region77: #{tpu_custom_call.1} parent=75 // pred_check
          %p773 = pneg %p224
        $region78: #{tpu_custom_call.1} parent=75 // pred_check_branch
          %775 = sbr.rel (%p773) target = $region80
        $region79: #{tpu_custom_call.1} parent=75 // pred_region
          %s776 = sand.u32 %s209, 1
          %s777 = scalar_lea.sflag [#allocation6], %s776
          %s778 = sand.u32 %s209, 1
          %s779 = smul.addr %s778, 8
          %s780 = scalar_lea.vmem [#allocation5], %s779
          %781 = dma.done %s777, 128
        $region80: #{tpu_custom_call.1} parent=75 // pred_fallthru
          _
      $region76: #{tpu_custom_call.1} parent=5 // pred_fallthru
        _
    $region6: #{tpu_custom_call.1} parent=1 // loop_footer
      %s31 = sadd.s32 1, %s27
    $region7: #{tpu_custom_call.1} parent=1 // loop_footer_branch
      %26 = sbr.rel target = $region3
    $region8: #{tpu_custom_call.1} parent=1 // loop_exit
      _
    %782 = vsyncpa [#allocation6], 1
    %s783 = scalar_lea.sflag [#allocation6], 1
    %784 = vsyncpa %s783, 1
    %785 = vsyncpa [#allocation8], 1

</llo_original>
